<compile_context>
chip_gen: v6e
topology: v6e:2x2x1
jax: 0.10.0
libtpu: 0.0.40
codegen_flags: <defaults>
</compile_context>

<pallas_src>
import functools
import math

import jax
import jax.numpy as jnp
import numpy as np
from jax.experimental import pallas as pl
from jax.experimental.pallas import tpu as pltpu

MIB = 1024 * 1024


# ---------------- kernel ----------------

def _outer_sum_kernel(a_ref, c_ref, o_ref, *, scaling):
    # a_ref: (S_blk, L_blk)  src rows (lane-dense)
    # c_ref: (T_blk, L_blk)  tgt rows (lane-dense, pre-tiled to folded width)
    # o_ref: (T_blk, S_blk, L_blk)
    a = a_ref[...]
    c = c_ref[...]
    if scaling != 1.0:
        c = c * scaling                      # scale the small block, not the slab
    # c broadcasts over the sublane axis (S_blk), a over the outer axis (T_blk):
    # no lane shuffles, unmasked full-lane stores when L_blk % 128 == 0.
    o_ref[...] = (a[None, :, :] + c[:, None, :]).astype(o_ref.dtype)


# ---------------- helpers ----------------

def _cdiv(a, b):
    return -(-a // b)


def _round_up(x, m):
    return _cdiv(x, m) * m


def _round_down(x, m):
    return (x // m) * m


def _vmem_capacity_bytes():
    try:
        return int(pltpu.get_tpu_info().vmem_capacity_bytes)
    except Exception:
        return 128 * MIB   # v5e/v6e physical VMEM; safe fallback


def _pick_blocks(tgt_len, src_rows, lane, itemsize, target_bytes, sub_align):
    """Pick (t_blk, s_blk, l_blk) with output block <= target_bytes.

    Bias growth toward t_blk (cuts redundant src re-reads), keep s_blk <= 64,
    and only block the lane axis when even a minimal (8, 8, lane) block would
    blow the budget.  All choices satisfy the (8, 128) tiling rule: each of
    the last-two block dims is a multiple of its quantum or the full dim.
    """
    # lane block
    l_blk = lane
    if 8 * 8 * l_blk * itemsize > target_bytes and lane > 128:
        l_blk = max(128, _round_down(target_bytes // (8 * 8 * itemsize), 128))
        l_blk = min(l_blk, _round_down(lane, 128))
    row_bytes = l_blk * itemsize

    # src-rows block: modest, shrink further if the lane rows are huge
    s_blk = src_rows if src_rows <= 64 else 64
    s_max = max(8, _round_down(target_bytes // (8 * row_bytes), 8))
    if s_blk > s_max:
        s_blk = s_max

    # tgt block: spend the remaining budget here
    t_max = max(8, _round_down(target_bytes // (s_blk * row_bytes), 8))
    if t_max >= sub_align:
        t_max = _round_down(t_max, sub_align)
    t_blk = tgt_len if tgt_len <= t_max else t_max

    # guarantee >=2 blocks along one parallel axis (v7x has 2 TensorCores);
    # prefer splitting the tgt axis so each core gets a contiguous half.
    if (_cdiv(tgt_len, t_blk) == 1 and _cdiv(src_rows, s_blk) == 1
            and _cdiv(lane, l_blk) == 1):
        half_t = _round_up(_cdiv(tgt_len, 2), 8)
        half_s = _round_up(_cdiv(src_rows, 2), 8)
        if half_t < tgt_len:
            t_blk = half_t
        elif half_s < src_rows:
            s_blk = half_s
    return t_blk, s_blk, l_blk


# ---------------- wrapper ----------------

def reformer_input_layer(src_embed, tgt_embed, *, input_layer="add", scaling=1.0):
    """Pallas implementation of ReformerInputLayer.forward."""
    src_len, batch, dim_s = src_embed.shape
    tgt_len, batch_t, dim_t = tgt_embed.shape
    assert batch == batch_t

    out_dtype = jnp.result_type(src_embed.dtype, tgt_embed.dtype)

    if input_layer == "add":
        assert dim_s == dim_t, (
            f"source embedding dim ({dim_s}) must match target embedding dim "
            f"({dim_t}) when using input layer {input_layer}"
        )
        dim_out = dim_s
        a = src_embed.astype(out_dtype)
        c = tgt_embed.astype(out_dtype)
        eff_scale = float(scaling)
    elif input_layer == "cat":
        dim_out = dim_s + dim_t
        # zero-pad to the concatenated width: cat == add of disjointly padded tensors
        a = jnp.pad(src_embed.astype(out_dtype), ((0, 0), (0, 0), (0, dim_t)))
        c = jnp.pad(tgt_embed.astype(out_dtype), ((0, 0), (0, 0), (dim_s, 0)))
        eff_scale = 1.0  # scaling only applies in 'add' mode
    else:
        raise ValueError(f"unsupported input_layer: {input_layer}")

    # Collapse (batch, dim_out) into one flat per-position row of width dp.
    dp = batch * dim_out

    # Lane fold: fold adjacent src rows into lanes so the output block's last
    # dim is a multiple of 128 (unmasked stores, dense writeback DMA).
    fold = 1
    if dp % 128 != 0:
        need = 128 // math.gcd(dp, 128)      # lcm(dp, 128) / dp
        if need > 1 and src_len % need == 0:
            fold = need
    lane = fold * dp
    src_rows = src_len // fold

    a2 = a.reshape(src_rows, lane)           # (src_len/fold, lane) -- lane-dense
    c2 = c.reshape(tgt_len, dp)
    if fold > 1:
        c2 = jnp.tile(c2, (1, fold))         # tiny: (tgt_len, lane)

    itemsize = jnp.dtype(out_dtype).itemsize
    sub_align = max(8, 32 // max(1, itemsize))   # 8 f32, 16 bf16, 32 int8/fp8

    vmem_cap = _vmem_capacity_bytes()
    # ~VMEM/8 output block: ~16 MiB on 128 MiB chips, ~8 MiB on v7x (64 MiB).
    target_bytes = min(16 * MIB, max(2 * MIB, vmem_cap // 8))

    t_blk, s_blk, l_blk = _pick_blocks(
        tgt_len, src_rows, lane, itemsize, target_bytes, sub_align)

    grid_t = _cdiv(tgt_len, t_blk)
    grid_s = _cdiv(src_rows, s_blk)
    grid_l = _cdiv(lane, l_blk)
    # src axis innermost: the tgt block (index (i, k)) stays resident across it.
    grid = (grid_t, grid_l, grid_s)

    out_blk_bytes = t_blk * s_blk * l_blk * itemsize
    in_blk_bytes = (t_blk + s_blk) * l_blk * itemsize
    vmem_need = 2 * (out_blk_bytes + in_blk_bytes) + 2 * MIB
    vmem_limit = int(min(vmem_cap - 8 * MIB, max(vmem_need, 32 * MIB)))

    out_flat = pl.pallas_call(
        functools.partial(_outer_sum_kernel, scaling=eff_scale),
        out_shape=jax.ShapeDtypeStruct((tgt_len, src_rows, lane), out_dtype),
        grid=grid,
        in_specs=[
            pl.BlockSpec((s_blk, l_blk), lambda i, k, j: (j, k)),   # src rows
            pl.BlockSpec((t_blk, l_blk), lambda i, k, j: (i, k)),   # tgt rows
        ],
        out_specs=pl.BlockSpec((t_blk, s_blk, l_blk), lambda i, k, j: (i, j, k)),
        compiler_params=pltpu.CompilerParams(
            dimension_semantics=("parallel", "parallel", "parallel"),
            vmem_limit_bytes=vmem_limit,
            allow_input_fusion=[True, True],
        ),
    )(a2, c2)

    # Layout plumbing only: (tgt, src/fold, fold*batch*dim) -> (tgt, src, batch, dim)
    return out_flat.reshape(tgt_len, src_len, batch, dim_out)


# ---------------- pure-JAX reference ----------------

def reference(src_embed, tgt_embed, *, input_layer="add", scaling=1.0):
    src_len = src_embed.shape[0]
    tgt_len = tgt_embed.shape[0]
    src_b = jnp.broadcast_to(src_embed[None], (tgt_len,) + src_embed.shape)
    tgt_b = jnp.broadcast_to(tgt_embed[:, None],
                             (tgt_len, src_len) + tgt_embed.shape[1:])
    if input_layer == "cat":
        return jnp.concatenate([src_b, tgt_b], axis=-1)
    return src_b + tgt_b * scaling


# ---------------- main ----------------

if __name__ == "__main__":
    key = jax.random.PRNGKey(0)
    k1, k2, k3, k4 = jax.random.split(key, 4)

    # --- lane-folded, divisible shapes ---
    src_len, tgt_len, batch, dim = 16, 8, 2, 32
    src_embed = jax.random.normal(k1, (src_len, batch, dim), dtype=jnp.float32)
    tgt_embed = jax.random.normal(k2, (tgt_len, batch, dim), dtype=jnp.float32)

    # 'add' mode with reformer_v1 scaling (0.5)
    out_add = jax.block_until_ready(
        reformer_input_layer(src_embed, tgt_embed, input_layer="add", scaling=0.5))
    ref_add = reference(src_embed, tgt_embed, input_layer="add", scaling=0.5)
    assert out_add.shape == (tgt_len, src_len, batch, dim)
    np.testing.assert_allclose(np.asarray(out_add), np.asarray(ref_add),
                               rtol=1e-6, atol=1e-6)

    # 'cat' mode
    out_cat = jax.block_until_ready(
        reformer_input_layer(src_embed, tgt_embed, input_layer="cat"))
    ref_cat = reference(src_embed, tgt_embed, input_layer="cat")
    assert out_cat.shape == (tgt_len, src_len, batch, 2 * dim)
    np.testing.assert_allclose(np.asarray(out_cat), np.asarray(ref_cat),
                               rtol=1e-6, atol=1e-6)

    # --- ragged, non-foldable shapes (exercises cdiv grid + masked last block) ---
    src_len2, tgt_len2, batch2, dim2 = 10, 9, 2, 24
    src2 = jax.random.normal(k3, (src_len2, batch2, dim2), dtype=jnp.float32)
    tgt2 = jax.random.normal(k4, (tgt_len2, batch2, dim2), dtype=jnp.float32)
    out2 = jax.block_until_ready(
        reformer_input_layer(src2, tgt2, input_layer="add", scaling=1.0))
    ref2 = reference(src2, tgt2, input_layer="add", scaling=1.0)
    assert out2.shape == (tgt_len2, src_len2, batch2, dim2)
    np.testing.assert_allclose(np.asarray(out2), np.asarray(ref2),
                               rtol=1e-6, atol=1e-6)

    print("KERNEL_OK")
</pallas_src>

<mosaic_0001>
module attributes {stable_mosaic.version = 11 : i64} {
  func.func @_outer_sum_kernel(%arg0: i32, %arg1: i32, %arg2: i32, %arg3: memref<8x128xf32, #tpu.memory_space<vmem>>, %arg4: memref<8x128xf32, #tpu.memory_space<vmem>>, %arg5: memref<8x8x128xf32, #tpu.memory_space<vmem>>) attributes {dimension_semantics = [#tpu.dimension_semantics<parallel>, #tpu.dimension_semantics<parallel>, #tpu.dimension_semantics<parallel>], iteration_bounds = array<i64: 1, 1, 1>, scalar_prefetch = 0 : i64, scratch_operands = 0 : i64, tpu.core_type = #tpu.core_type<tc>, window_params = [{transform_indices = @transform_0, window_bounds = array<i64: 8, 128>}, {transform_indices = @transform_1, window_bounds = array<i64: 8, 128>}, {transform_indices = @transform_2, window_bounds = array<i64: 8, 8, 128>}]} {
    %c0 = arith.constant 0 : index
    %c0_0 = arith.constant 0 : index
    %0 = vector.load %arg3[%c0, %c0_0] : memref<8x128xf32, #tpu.memory_space<vmem>>, vector<8x128xf32>
    %c0_1 = arith.constant 0 : index
    %c0_2 = arith.constant 0 : index
    %1 = vector.load %arg4[%c0_1, %c0_2] : memref<8x128xf32, #tpu.memory_space<vmem>>, vector<8x128xf32>
    %cst = arith.constant 5.000000e-01 : f32
    %2 = vector.broadcast %cst : f32 to vector<8x128xf32>
    %3 = arith.mulf %1, %2 : vector<8x128xf32>
    %4 = vector.shape_cast %0 : vector<8x128xf32> to vector<1x8x128xf32>
    %5 = vector.shape_cast %3 : vector<8x128xf32> to vector<8x1x128xf32>
    %6 = vector.broadcast %4 : vector<1x8x128xf32> to vector<8x8x128xf32>
    %7 = vector.broadcast %5 : vector<8x1x128xf32> to vector<8x8x128xf32>
    %8 = arith.addf %6, %7 : vector<8x8x128xf32>
    %c0_3 = arith.constant 0 : index
    %c0_4 = arith.constant 0 : index
    %c0_5 = arith.constant 0 : index
    %9 = vector.load %arg5[%c0_3, %c0_4, %c0_5] : memref<8x8x128xf32, #tpu.memory_space<vmem>>, vector<8x8x128xf32>
    tpu.vector_store %arg5[%c0_3, %c0_4, %c0_5], %8 {strides = array<i32>} : memref<8x8x128xf32, #tpu.memory_space<vmem>>, vector<8x8x128xf32>,
    return
  }
  func.func @transform_0(%arg0: i32, %arg1: i32, %arg2: i32) -> (i32, i32) {
    %c0_i32 = arith.constant 0 : i32
    return %arg2, %arg1 : i32, i32
  }
  func.func @transform_1(%arg0: i32, %arg1: i32, %arg2: i32) -> (i32, i32) {
    %c0_i32 = arith.constant 0 : i32
    return %arg0, %arg1 : i32, i32
  }
  func.func @transform_2(%arg0: i32, %arg1: i32, %arg2: i32) -> (i32, i32, i32) {
    %c0_i32 = arith.constant 0 : i32
    return %arg0, %arg2, %arg1 : i32, i32, i32
  }
}

</mosaic_0001>

<llo_original>
// kernel: tpu_custom_call.1
$region0: #{tpu_custom_call.1}
  #allocation0 [shape = 'u32[]', space=smem, size = 0x4, offset = 0x4, fixed_abs, tag = 'smem constant byte address 0x4 - core index']
  #allocation1 [shape = 'u32[144,128]{1,0:T(1,128)}', space=vmem, size = 0x12000, scoped, tag = 'internal scratch']
  %s0 = inlined_call_operand.hbm [shape: f32[8,128], index: 0, kind: input, shape index: {}]
  %s1 = inlined_call_operand.hbm [shape: f32[8,128], index: 1, kind: input, shape index: {}]
  %s2 = inlined_call_operand.hbm [shape: f32[8,8,128], index: 2, kind: output, shape index: {}]
  %s3 = sld [smem:[#allocation0]]
  $region26: #{tpu_custom_call.1} parent=0
    _
  %s5 = ssub.s32 1, %s3
  %s6 = scalar_select 0, %s5, %s3
  $region1: #{tpu_custom_call.1} parent=0
    #allocation2 [shape = 'u8[4096]{0}', space=vmem, size = 0x1000, scoped, tag = 'input window, operand 0, single buffered']
    #allocation3 [shape = 's32[1]{0}', space=sflag, size = 0x4, scoped, tag = 'scoped memory for tpu_custom_call.1']
    #allocation4 [shape = 's32[1]{0}', space=sflag, size = 0x4, scoped, tag = 'scoped memory for tpu_custom_call.1']
    #allocation5 [shape = 'u8[4096]{0}', space=vmem, size = 0x1000, scoped, tag = 'input window, operand 1, single buffered']
    #allocation6 [shape = 's32[1]{0}', space=sflag, size = 0x4, scoped, tag = 'scoped memory for tpu_custom_call.1']
    #allocation7 [shape = 'u8[32768]{0}', space=vmem, size = 0x8000, scoped, tag = 'output window, operand 0, single buffered']
    %7 = vsyncpa [#allocation3], 0
    %8 = vsyncpa [#allocation6], 0
    %9 = vsyncpa [#allocation4], 0
    // Predicated region
    $region2: #{tpu_custom_call.1} parent=1 // pred_check
      _
    $region3: #{tpu_custom_call.1} parent=1 // pred_check_branch
      %11 = sbr.rel (0) target = $region5
    $region4: #{tpu_custom_call.1} parent=1 // pred_region
      %s13 = ssub.s32 128, 128
      %14 = vsyncadd [#allocation3], %s13
      %s16 = sshll.u32 [#allocation2], 4
      %s17 = int_to_ptr.vmem [resolvable:$true] %s16
      %19 = dma.hbm_to_vmem [thread:$0]  %s0, 128, %s17, [#allocation3]
    $region5: #{tpu_custom_call.1} parent=1 // pred_fallthru
      _
    // Predicated region
    $region6: #{tpu_custom_call.1} parent=1 // pred_check
      _
    $region7: #{tpu_custom_call.1} parent=1 // pred_check_branch
      %21 = sbr.rel (0) target = $region9
    $region8: #{tpu_custom_call.1} parent=1 // pred_region
      %s23 = ssub.s32 128, 128
      %24 = vsyncadd [#allocation6], %s23
      %s26 = sshll.u32 [#allocation5], 4
      %s27 = int_to_ptr.vmem [resolvable:$true] %s26
      %29 = dma.hbm_to_vmem [thread:$0]  %s1, 128, %s27, [#allocation6]
    $region9: #{tpu_custom_call.1} parent=1 // pred_fallthru
      _
    // Predicated region
    $region10: #{tpu_custom_call.1} parent=1 // pred_check
      _
    $region11: #{tpu_custom_call.1} parent=1 // pred_check_branch
      %31 = sbr.rel (0) target = $region13
    $region12: #{tpu_custom_call.1} parent=1 // pred_region
      %32 = dma.done [#allocation3], 128
    $region13: #{tpu_custom_call.1} parent=1 // pred_fallthru
      _
    // Predicated region
    $region14: #{tpu_custom_call.1} parent=1 // pred_check
      _
    $region15: #{tpu_custom_call.1} parent=1 // pred_check_branch
      %34 = sbr.rel (0) target = $region17
    $region16: #{tpu_custom_call.1} parent=1 // pred_region
      %35 = dma.done [#allocation6], 128
    $region17: #{tpu_custom_call.1} parent=1 // pred_fallthru
      _
    %v36 = vld [vmem:[#allocation2] sm:$0xff]
    %v37 = vld [vmem:[#allocation5] sm:$0xff]
    %v38 = vmul.f32 %v37, 0.5
    %v40 = vcombine.high %v38, %v38
    %v42 = vunpack.c.l.s4 1966171168
    %v43 = vunpack.c.0.s8 %v42
    %v44 = vlaneseq
    %v45 = vshrl.u32 %v44, 7
    %v46 = vsub.s32 %v43, %v45
    %v47 = vrot.slane %v38, %v46
    %v49 = vunpack.c.l.s4 1966171168
    %v50 = vunpack.c.0.s8 %v49
    %v51 = vlaneseq
    %v52 = vshrl.u32 %v51, 7
    %v53 = vsub.s32 %v50, %v52
    %v54 = vrot.slane %v40, %v53
    %v55 = vcombine.high %v47, %v47
    %v56 = vcombine.high %v54, %v54
    %v58 = vunpack.c.l.s4 1966171168
    %v59 = vunpack.c.0.s8 %v58
    %v60 = vlaneseq
    %v61 = vshrl.u32 %v60, 7
    %v62 = vsub.s32 %v59, %v61
    %v63 = vrot.slane %v47, %v62
    %v65 = vunpack.c.l.s4 1966171168
    %v66 = vunpack.c.0.s8 %v65
    %v67 = vlaneseq
    %v68 = vshrl.u32 %v67, 7
    %v69 = vsub.s32 %v66, %v68
    %v70 = vrot.slane %v54, %v69
    %v72 = vunpack.c.l.s4 1966171168
    %v73 = vunpack.c.0.s8 %v72
    %v74 = vlaneseq
    %v75 = vshrl.u32 %v74, 7
    %v76 = vsub.s32 %v73, %v75
    %v77 = vrot.slane %v55, %v76
    %v79 = vunpack.c.l.s4 1966171168
    %v80 = vunpack.c.0.s8 %v79
    %v81 = vlaneseq
    %v82 = vshrl.u32 %v81, 7
    %v83 = vsub.s32 %v80, %v82
    %v84 = vrot.slane %v56, %v83
    %v85 = vcombine.high %v63, %v63
    %v86 = vcombine.high %v70, %v70
    %v87 = vcombine.high %v77, %v77
    %v88 = vcombine.high %v84, %v84
    %v89 = vlaneseq
    %v90 = vshrl.u32 %v89, 7
    %v91 = vsub.s32 0, %v90
    %v92 = vrot.slane %v63, %v91
    %v93 = vlaneseq
    %v94 = vshrl.u32 %v93, 7
    %v95 = vsub.s32 0, %v94
    %v96 = vrot.slane %v77, %v95
    %v97 = vlaneseq
    %v98 = vshrl.u32 %v97, 7
    %v99 = vsub.s32 0, %v98
    %v100 = vrot.slane %v85, %v99
    %v101 = vlaneseq
    %v102 = vshrl.u32 %v101, 7
    %v103 = vsub.s32 0, %v102
    %v104 = vrot.slane %v87, %v103
    %v105 = vlaneseq
    %v106 = vshrl.u32 %v105, 7
    %v107 = vsub.s32 0, %v106
    %v108 = vrot.slane %v70, %v107
    %v109 = vlaneseq
    %v110 = vshrl.u32 %v109, 7
    %v111 = vsub.s32 0, %v110
    %v112 = vrot.slane %v84, %v111
    %v113 = vlaneseq
    %v114 = vshrl.u32 %v113, 7
    %v115 = vsub.s32 0, %v114
    %v116 = vrot.slane %v86, %v115
    %v117 = vlaneseq
    %v118 = vshrl.u32 %v117, 7
    %v119 = vsub.s32 0, %v118
    %v120 = vrot.slane %v88, %v119
    %v129 = vadd.f32 %v36, %v92
    %v130 = vadd.f32 %v36, %v96
    %v131 = vadd.f32 %v36, %v100
    %v132 = vadd.f32 %v36, %v104
    %v133 = vadd.f32 %v36, %v108
    %v134 = vadd.f32 %v36, %v112
    %v135 = vadd.f32 %v36, %v116
    %v136 = vadd.f32 %v36, %v120
    %137 = vst [vmem:[#allocation7] sm:$0xff] %v129
    %138 = vst [vmem:[#allocation7 + $0x8] sm:$0xff] %v130
    %139 = vst [vmem:[#allocation7 + $0x10] sm:$0xff] %v131
    %140 = vst [vmem:[#allocation7 + $0x18] sm:$0xff] %v132
    %141 = vst [vmem:[#allocation7 + $0x20] sm:$0xff] %v133
    %142 = vst [vmem:[#allocation7 + $0x28] sm:$0xff] %v134
    %143 = vst [vmem:[#allocation7 + $0x30] sm:$0xff] %v135
    %144 = vst [vmem:[#allocation7 + $0x38] sm:$0xff] %v136
    // Predicated region
    $region18: #{tpu_custom_call.1} parent=1 // pred_check
      _
    $region19: #{tpu_custom_call.1} parent=1 // pred_check_branch
      %146 = sbr.rel (0) target = $region21
    $region20: #{tpu_custom_call.1} parent=1 // pred_region
      %s148 = ssub.s32 1024, 1024
      %149 = vsyncadd [#allocation4], %s148
      %s150 = sshll.u32 [#allocation7], 4
      %s151 = int_to_ptr.vmem [resolvable:$true] %s150
      %156 = dma.vmem_to_hbm [thread:$0]  %s151, 1024, %s2, [#allocation4], 128, 128, 8
    $region21: #{tpu_custom_call.1} parent=1 // pred_fallthru
      _
    // Predicated region
    $region22: #{tpu_custom_call.1} parent=1 // pred_check
      _
    $region23: #{tpu_custom_call.1} parent=1 // pred_check_branch
      %158 = sbr.rel (0) target = $region25
    $region24: #{tpu_custom_call.1} parent=1 // pred_region
      %159 = dma.done [#allocation4], 1024
    $region25: #{tpu_custom_call.1} parent=1 // pred_fallthru
      _
    %160 = vsyncpa [#allocation3], 1
    %161 = vsyncpa [#allocation6], 1
    %162 = vsyncpa [#allocation4], 1

</llo_original>
